<compile_context>
chip_gen: v6e
topology: v6e:2x2x1
jax: 0.10.0
libtpu: 0.0.40
codegen_flags: <defaults>
</compile_context>

<pallas_src>
import functools

import jax
import jax.numpy as jnp
from jax import lax
from jax.experimental import pallas as pl
from jax.experimental.pallas import tpu as pltpu


def _round_up(x, m):
    return (x + m - 1) // m * m


def _cdiv(a, b):
    return -(-a // b)


def _hardswish(x):
    # PyTorch Hardswish: x * clamp(x + 3, 0, 6) / 6
    return x * jnp.clip(x + 3.0, 0.0, 6.0) * (1.0 / 6.0)


def _tpu_config():
    """(num_tensorcores, vmem_limit_bytes) for the local TPU generation."""
    num_tc, phys_vmem = 1, 128 * 1024 * 1024            # v5e / v6e: 1 TC, 128 MiB
    try:
        kind = jax.devices()[0].device_kind.lower()
        if "v7" in kind:
            num_tc, phys_vmem = 2, 64 * 1024 * 1024     # v7x: 2 TCs, 64 MiB each
    except Exception:
        pass
    return num_tc, min(100 * 1024 * 1024, phys_vmem * 3 // 4)


def critic_adv_kernel(x_ref,
                      w1_ref, b1_ref,
                      w2_ref, b2_ref,
                      w3_ref, b3_ref,
                      w4_ref, b4_ref,
                      o_ref):
    # x_ref : (tb, Sp) bf16 -- batch tile in natural layout, zero-padded feats
    # w*_ref: (out, in) bf16 -- PyTorch layout, feature-padded, VMEM-resident
    # b*_ref: (Mp, 1)  f32
    # w4_ref: (Mp, 1)  f32 ;  b4_ref: (1, 1) f32 scalar in SMEM
    # o_ref : (1, tb)  f32  -- lane-dense value slab (batch on lanes)

    # Layer 1: h = W1 @ x^T + b1.  Contract the feature axis of both operands
    # so the batch ends up on the lane axis (MXU handles the transposed rhs).
    h = lax.dot_general(w1_ref[...], x_ref[...],
                        dimension_numbers=(((1,), (1,)), ((), ())),
                        preferred_element_type=jnp.float32) + b1_ref[...]
    h = jnp.maximum(h, 0.0)                                       # ReLU

    # Layer 2: Linear + Hardswish
    h = jnp.dot(w2_ref[...], h.astype(w2_ref.dtype),
                preferred_element_type=jnp.float32) + b2_ref[...]
    h = _hardswish(h)

    # Layer 3: Linear + Hardswish
    h = jnp.dot(w3_ref[...], h.astype(w3_ref.dtype),
                preferred_element_type=jnp.float32) + b3_ref[...]
    h = _hardswish(h)

    # Layer 4: Linear(mid, 1) as VPU multiply + cross-sublane (XLU) reduce
    # (no N=1 MXU matmul); bias is an SMEM scalar.
    v = jnp.sum(h * w4_ref[...], axis=0, keepdims=True) + b4_ref[0, 0]
    o_ref[...] = v.astype(o_ref.dtype)


@functools.partial(jax.jit, static_argnames=("batch_tile",))
def critic_adv_forward(state, params, batch_tile=None):
    """state: [B, state_dim] f32 -> value: [B, 1] f32."""
    B, state_dim = state.shape
    w1, b1, w2, b2, w3, b3, w4, b4 = params
    Mp, Sp = w1.shape
    assert state_dim <= Sp, (state_dim, Sp)

    num_tc, vmem_limit = _tpu_config()
    if batch_tile is None:
        batch_tile = 1024 if num_tc == 1 else 512

    # --- batch-tile selection (batch is the lane axis of the output block,
    # so tb stays a multiple of 128) ---
    bp128 = _round_up(B, 128)
    tb = min(_round_up(batch_tile, 128), bp128)
    if num_tc > 1:
        # Each TC wants >=2 grid steps (overlap prefetch with compute) and an
        # even split so both cores stay balanced.
        while tb > 128 and (_cdiv(bp128, tb) < 2 * num_tc
                            or _cdiv(bp128, tb) % num_tc != 0):
            tb -= 128
    Bp = _round_up(bp128, tb)
    grid = Bp // tb

    # Pad batch & features (feature padding MUST be real zeros: padded K
    # columns meet zero-padded weight columns) and cast to bf16 in one fused
    # XLA op.  No wrapper-side transpose.
    x_in = jnp.pad(state, ((0, Bp - B), (0, Sp - state_dim))).astype(w1.dtype)

    n_bytes = lambda a: a.size * a.dtype.itemsize
    flops = 2 * Bp * (Sp * Mp + 2 * Mp * Mp + Mp)
    bytes_accessed = n_bytes(x_in) + sum(n_bytes(p) for p in params) + Bp * 4
    cost = pl.CostEstimate(flops=int(flops), transcendentals=0,
                           bytes_accessed=int(bytes_accessed))

    # Weights / biases: constant index map across the grid -> single VMEM copy.
    resident = lambda a: pl.BlockSpec(a.shape, lambda i: (0, 0),
                                      pipeline_mode=pl.Buffered(1))
    # x is the only per-step stream; deepen its pipeline (up to 3 buffers) to
    # hide HBM latency behind the short compute phase at small/medium mid_dim.
    x_bufs = max(1, min(3, grid))

    out = pl.pallas_call(
        critic_adv_kernel,
        out_shape=jax.ShapeDtypeStruct((1, Bp), jnp.float32),
        grid_spec=pltpu.PrefetchScalarGridSpec(
            num_scalar_prefetch=0,
            grid=(grid,),
            in_specs=[
                pl.BlockSpec((tb, Sp), lambda i: (i, 0),
                             pipeline_mode=pl.Buffered(x_bufs)),   # x stream
                resident(w1), resident(b1),                        # layer 1
                resident(w2), resident(b2),                        # layer 2
                resident(w3), resident(b3),                        # layer 3
                resident(w4),                                      # head weight
                pl.BlockSpec(memory_space=pltpu.MemorySpace.SMEM), # head bias
            ],
            out_specs=pl.BlockSpec((1, tb), lambda i: (0, i)),     # lane-dense
        ),
        compiler_params=pltpu.CompilerParams(
            dimension_semantics=("parallel",),
            vmem_limit_bytes=int(vmem_limit)),
        cost_estimate=cost,
    )(x_in, w1, b1, w2, b2, w3, b3, w4, b4)

    return out[0, :B].reshape(B, 1)


def _orthogonal(key, rows, cols, gain=1.0):
    # Deterministic orthogonal init (mirrors torch.nn.init.orthogonal_).
    n, m = max(rows, cols), min(rows, cols)
    a = jax.random.normal(key, (n, m), dtype=jnp.float32)
    q, r = jnp.linalg.qr(a)
    d = jnp.diagonal(r)
    q = q * jnp.where(d == 0, 1.0, jnp.sign(d))[None, :]
    w = q if rows >= cols else q.T          # shape [rows, cols]
    return gain * w


def _feature_pads(state_dim, mid_dim):
    """Minimal TPU-friendly feature padding.

    State features sit on the lane axis of the (tb, Sp) x block (full dim, so
    no 128 requirement) and on the W1 contraction axis -> bf16 packing (16)
    is enough.  mid_dim only needs 16 when small; larger models pad to the
    MXU tile (128, or 256 on v6e/v7x when 128 < mid_dim <= 256).
    """
    sp = _round_up(state_dim, 16)
    if mid_dim <= 64:
        mp = _round_up(mid_dim, 16)
    else:
        gran = 128
        try:
            kind = jax.devices()[0].device_kind.lower()
            if ("v6" in kind or "v7" in kind) and 128 < mid_dim <= 256:
                gran = 256          # fill the 2x256x256 MXU
        except Exception:
            pass
        mp = _round_up(mid_dim, gran)
    return sp, mp


def init_params(key, state_dim, mid_dim, *, weight_dtype=jnp.bfloat16):
    """Weights in PyTorch [out, in] layout, feature dims zero-padded just
    enough for TPU layout (see _feature_pads).  Matmul weights in bf16
    (f32 MXU accumulation); biases and the N=1 head in f32."""
    Sp, Mp = _feature_pads(state_dim, mid_dim)
    ks = jax.random.split(key, 8)

    def kaiming_uniform(k, fan_in, shape):
        bound = (1.0 / fan_in) ** 0.5
        return jax.random.uniform(k, shape, jnp.float32, -bound, bound)

    def pad2(a, rows, cols):
        return jnp.pad(a, ((0, rows - a.shape[0]), (0, cols - a.shape[1])))

    # Layers 1-3: PyTorch default Linear init (uniform +/- 1/sqrt(fan_in)).
    w1 = pad2(kaiming_uniform(ks[0], state_dim, (mid_dim, state_dim)), Mp, Sp)
    b1 = pad2(kaiming_uniform(ks[1], state_dim, (mid_dim, 1)), Mp, 1)
    w2 = pad2(kaiming_uniform(ks[2], mid_dim, (mid_dim, mid_dim)), Mp, Mp)
    b2 = pad2(kaiming_uniform(ks[3], mid_dim, (mid_dim, 1)), Mp, 1)
    w3 = pad2(kaiming_uniform(ks[4], mid_dim, (mid_dim, mid_dim)), Mp, Mp)
    b3 = pad2(kaiming_uniform(ks[5], mid_dim, (mid_dim, 1)), Mp, 1)
    # Head: layer_norm(layer, std=0.5) -> orthogonal weight (gain 0.5), bias 1e-6.
    w4 = pad2(_orthogonal(ks[6], 1, mid_dim, gain=0.5).T, Mp, 1)   # (Mp, 1) f32
    b4 = jnp.full((1, 1), 1e-6, dtype=jnp.float32)

    w1, w2, w3 = (w.astype(weight_dtype) for w in (w1, w2, w3))
    return (w1, b1, w2, b2, w3, b3, w4, b4)


def _reference_forward(state, params):
    """Pure-JAX reference mirroring the kernel's dtype handling."""
    w1, b1, w2, b2, w3, b3, w4, b4 = params
    Sp = w1.shape[1]
    x = jnp.pad(state, ((0, 0), (0, Sp - state.shape[1]))).astype(w1.dtype)
    h = jnp.dot(x, w1.T, preferred_element_type=jnp.float32) + b1.T
    h = jnp.maximum(h, 0.0)
    h = jnp.dot(h.astype(w2.dtype), w2.T,
                preferred_element_type=jnp.float32) + b2.T
    h = _hardswish(h)
    h = jnp.dot(h.astype(w3.dtype), w3.T,
                preferred_element_type=jnp.float32) + b3.T
    h = _hardswish(h)
    return jnp.dot(h, w4) + b4          # (B, 1)


if __name__ == "__main__":
    key = jax.random.PRNGKey(0)
    k_x, k_p = jax.random.split(key)

    # Non-round shapes exercise the batch pad and minimal feature padding.
    batch, state_dim, mid_dim = 300, 24, 48
    state = jax.random.normal(k_x, (batch, state_dim), dtype=jnp.float32)
    params = init_params(k_p, state_dim, mid_dim)

    out = critic_adv_forward(state, params)
    out = jax.block_until_ready(out)

    ref = _reference_forward(state, params)
    assert out.shape == (batch, 1), out.shape
    assert jnp.allclose(out, ref, atol=2e-3, rtol=2e-3), (
        float(jnp.max(jnp.abs(out - ref))))

    print("KERNEL_OK")
</pallas_src>

<mosaic_0001>
module attributes {stable_mosaic.version = 11 : i64} {
  func.func @critic_adv_kernel(%arg0: i32, %arg1: memref<384x32xbf16, #tpu.memory_space<vmem>>, %arg2: memref<48x32xbf16, #tpu.memory_space<vmem>>, %arg3: memref<48x1xf32, #tpu.memory_space<vmem>>, %arg4: memref<48x48xbf16, #tpu.memory_space<vmem>>, %arg5: memref<48x1xf32, #tpu.memory_space<vmem>>, %arg6: memref<48x48xbf16, #tpu.memory_space<vmem>>, %arg7: memref<48x1xf32, #tpu.memory_space<vmem>>, %arg8: memref<48x1xf32, #tpu.memory_space<vmem>>, %arg9: memref<1x1xf32, #tpu.memory_space<smem>>, %arg10: memref<1x384xf32, #tpu.memory_space<vmem>>) attributes {dimension_semantics = [#tpu.dimension_semantics<parallel>], iteration_bounds = array<i64: 1>, scalar_prefetch = 0 : i64, scratch_operands = 0 : i64, tpu.core_type = #tpu.core_type<tc>, window_params = [{pipeline_mode = #tpu.pipeline_mode<synchronous>, transform_indices = @transform_0, window_bounds = array<i64: 384, 32>}, {pipeline_mode = #tpu.pipeline_mode<synchronous>, transform_indices = @transform_1, window_bounds = array<i64: 48, 32>}, {pipeline_mode = #tpu.pipeline_mode<synchronous>, transform_indices = @transform_2, window_bounds = array<i64: 48, 1>}, {pipeline_mode = #tpu.pipeline_mode<synchronous>, transform_indices = @transform_3, window_bounds = array<i64: 48, 48>}, {pipeline_mode = #tpu.pipeline_mode<synchronous>, transform_indices = @transform_4, window_bounds = array<i64: 48, 1>}, {pipeline_mode = #tpu.pipeline_mode<synchronous>, transform_indices = @transform_5, window_bounds = array<i64: 48, 48>}, {pipeline_mode = #tpu.pipeline_mode<synchronous>, transform_indices = @transform_6, window_bounds = array<i64: 48, 1>}, {pipeline_mode = #tpu.pipeline_mode<synchronous>, transform_indices = @transform_7, window_bounds = array<i64: 48, 1>}, {transform_indices = @transform_8, window_bounds = array<i64: 1, 1>}, {transform_indices = @transform_9, window_bounds = array<i64: 1, 384>}]} {
    %c0 = arith.constant 0 : index
    %c0_0 = arith.constant 0 : index
    %0 = vector.load %arg2[%c0, %c0_0] : memref<48x32xbf16, #tpu.memory_space<vmem>>, vector<48x32xbf16>
    %c0_1 = arith.constant 0 : index
    %c0_2 = arith.constant 0 : index
    %1 = vector.load %arg1[%c0_1, %c0_2] : memref<384x32xbf16, #tpu.memory_space<vmem>>, vector<384x32xbf16>
    %cst = arith.constant dense<0.000000e+00> : vector<48x384xf32>
    %2 = tpu.matmul %0, %1, %cst {dimension_numbers = #tpu.dot_dimension_numbers<[1], [1], [0], [0], [0, 0, 1, 0], [], []>} : vector<48x32xbf16>, vector<384x32xbf16>, vector<48x384xf32> -> vector<48x384xf32>
    %c0_3 = arith.constant 0 : index
    %c0_4 = arith.constant 0 : index
    %3 = vector.load %arg3[%c0_3, %c0_4] : memref<48x1xf32, #tpu.memory_space<vmem>>, vector<48x1xf32>
    %4 = vector.broadcast %3 : vector<48x1xf32> to vector<48x384xf32>
    %5 = arith.addf %2, %4 : vector<48x384xf32>
    %cst_5 = arith.constant 0.000000e+00 : f32
    %6 = vector.broadcast %cst_5 : f32 to vector<48x384xf32>
    %7 = arith.maximumf %5, %6 : vector<48x384xf32>
    %c0_6 = arith.constant 0 : index
    %c0_7 = arith.constant 0 : index
    %8 = vector.load %arg4[%c0_6, %c0_7] : memref<48x48xbf16, #tpu.memory_space<vmem>>, vector<48x48xbf16>
    %9 = arith.truncf %7 : vector<48x384xf32> to vector<48x384xbf16>
    %cst_8 = arith.constant dense<0.000000e+00> : vector<48x384xf32>
    %10 = tpu.matmul %8, %9, %cst_8 {dimension_numbers = #tpu.dot_dimension_numbers<[1], [0], [0], [1], [0, 0, 1, 1], [], []>} : vector<48x48xbf16>, vector<48x384xbf16>, vector<48x384xf32> -> vector<48x384xf32>
    %c0_9 = arith.constant 0 : index
    %c0_10 = arith.constant 0 : index
    %11 = vector.load %arg5[%c0_9, %c0_10] : memref<48x1xf32, #tpu.memory_space<vmem>>, vector<48x1xf32>
    %12 = vector.broadcast %11 : vector<48x1xf32> to vector<48x384xf32>
    %13 = arith.addf %10, %12 : vector<48x384xf32>
    %cst_11 = arith.constant 3.000000e+00 : f32
    %14 = vector.broadcast %cst_11 : f32 to vector<48x384xf32>
    %15 = arith.addf %13, %14 : vector<48x384xf32>
    %cst_12 = arith.constant 0.000000e+00 : f32
    %cst_13 = arith.constant 6.000000e+00 : f32
    %16 = vector.broadcast %cst_12 : f32 to vector<48x384xf32>
    %17 = arith.maximumf %16, %15 : vector<48x384xf32>
    %18 = vector.broadcast %cst_13 : f32 to vector<48x384xf32>
    %19 = arith.minimumf %18, %17 : vector<48x384xf32>
    %20 = arith.mulf %13, %19 : vector<48x384xf32>
    %cst_14 = arith.constant 0.166666672 : f32
    %21 = vector.broadcast %cst_14 : f32 to vector<48x384xf32>
    %22 = arith.mulf %20, %21 : vector<48x384xf32>
    %c0_15 = arith.constant 0 : index
    %c0_16 = arith.constant 0 : index
    %23 = vector.load %arg6[%c0_15, %c0_16] : memref<48x48xbf16, #tpu.memory_space<vmem>>, vector<48x48xbf16>
    %24 = arith.truncf %22 : vector<48x384xf32> to vector<48x384xbf16>
    %cst_17 = arith.constant dense<0.000000e+00> : vector<48x384xf32>
    %25 = tpu.matmul %23, %24, %cst_17 {dimension_numbers = #tpu.dot_dimension_numbers<[1], [0], [0], [1], [0, 0, 1, 1], [], []>} : vector<48x48xbf16>, vector<48x384xbf16>, vector<48x384xf32> -> vector<48x384xf32>
    %c0_18 = arith.constant 0 : index
    %c0_19 = arith.constant 0 : index
    %26 = vector.load %arg7[%c0_18, %c0_19] : memref<48x1xf32, #tpu.memory_space<vmem>>, vector<48x1xf32>
    %27 = vector.broadcast %26 : vector<48x1xf32> to vector<48x384xf32>
    %28 = arith.addf %25, %27 : vector<48x384xf32>
    %cst_20 = arith.constant 3.000000e+00 : f32
    %29 = vector.broadcast %cst_20 : f32 to vector<48x384xf32>
    %30 = arith.addf %28, %29 : vector<48x384xf32>
    %cst_21 = arith.constant 0.000000e+00 : f32
    %cst_22 = arith.constant 6.000000e+00 : f32
    %31 = vector.broadcast %cst_21 : f32 to vector<48x384xf32>
    %32 = arith.maximumf %31, %30 : vector<48x384xf32>
    %33 = vector.broadcast %cst_22 : f32 to vector<48x384xf32>
    %34 = arith.minimumf %33, %32 : vector<48x384xf32>
    %35 = arith.mulf %28, %34 : vector<48x384xf32>
    %cst_23 = arith.constant 0.166666672 : f32
    %36 = vector.broadcast %cst_23 : f32 to vector<48x384xf32>
    %37 = arith.mulf %35, %36 : vector<48x384xf32>
    %c0_24 = arith.constant 0 : index
    %c0_25 = arith.constant 0 : index
    %38 = vector.load %arg8[%c0_24, %c0_25] : memref<48x1xf32, #tpu.memory_space<vmem>>, vector<48x1xf32>
    %39 = vector.broadcast %38 : vector<48x1xf32> to vector<48x384xf32>
    %40 = arith.mulf %37, %39 : vector<48x384xf32>
    %cst_26 = arith.constant dense<0.000000e+00> : vector<384xf32>
    %41 = vector.multi_reduction <add>, %40, %cst_26 [0] : vector<48x384xf32> to vector<384xf32>
    %42 = vector.shape_cast %41 : vector<384xf32> to vector<1x384xf32>
    %c0_27 = arith.constant 0 : index
    %c0_28 = arith.constant 0 : index
    %43 = memref.load %arg9[%c0_27, %c0_28] : memref<1x1xf32, #tpu.memory_space<smem>>
    %44 = vector.broadcast %43 : f32 to vector<1x384xf32>
    %45 = arith.addf %42, %44 : vector<1x384xf32>
    %c0_29 = arith.constant 0 : index
    %c0_30 = arith.constant 0 : index
    %46 = vector.load %arg10[%c0_29, %c0_30] : memref<1x384xf32, #tpu.memory_space<vmem>>, vector<1x384xf32>
    tpu.vector_store %arg10[%c0_29, %c0_30], %45 {strides = array<i32>} : memref<1x384xf32, #tpu.memory_space<vmem>>, vector<1x384xf32>,
    return
  }
  func.func @transform_0(%arg0: i32) -> (i32, i32) {
    %c0_i32 = arith.constant 0 : i32
    %c0_i32_0 = arith.constant 0 : i32
    return %arg0, %c0_i32 : i32, i32
  }
  func.func @transform_1(%arg0: i32) -> (i32, i32) {
    %c0_i32 = arith.constant 0 : i32
    %c0_i32_0 = arith.constant 0 : i32
    %c0_i32_1 = arith.constant 0 : i32
    return %c0_i32, %c0_i32_0 : i32, i32
  }
  func.func @transform_2(%arg0: i32) -> (i32, i32) {
    %c0_i32 = arith.constant 0 : i32
    %c0_i32_0 = arith.constant 0 : i32
    %c0_i32_1 = arith.constant 0 : i32
    return %c0_i32, %c0_i32_0 : i32, i32
  }
  func.func @transform_3(%arg0: i32) -> (i32, i32) {
    %c0_i32 = arith.constant 0 : i32
    %c0_i32_0 = arith.constant 0 : i32
    %c0_i32_1 = arith.constant 0 : i32
    return %c0_i32, %c0_i32_0 : i32, i32
  }
  func.func @transform_4(%arg0: i32) -> (i32, i32) {
    %c0_i32 = arith.constant 0 : i32
    %c0_i32_0 = arith.constant 0 : i32
    %c0_i32_1 = arith.constant 0 : i32
    return %c0_i32, %c0_i32_0 : i32, i32
  }
  func.func @transform_5(%arg0: i32) -> (i32, i32) {
    %c0_i32 = arith.constant 0 : i32
    %c0_i32_0 = arith.constant 0 : i32
    %c0_i32_1 = arith.constant 0 : i32
    return %c0_i32, %c0_i32_0 : i32, i32
  }
  func.func @transform_6(%arg0: i32) -> (i32, i32) {
    %c0_i32 = arith.constant 0 : i32
    %c0_i32_0 = arith.constant 0 : i32
    %c0_i32_1 = arith.constant 0 : i32
    return %c0_i32, %c0_i32_0 : i32, i32
  }
  func.func @transform_7(%arg0: i32) -> (i32, i32) {
    %c0_i32 = arith.constant 0 : i32
    %c0_i32_0 = arith.constant 0 : i32
    %c0_i32_1 = arith.constant 0 : i32
    return %c0_i32, %c0_i32_0 : i32, i32
  }
  func.func @transform_8(%arg0: i32) -> (i32, i32) {
    %c0_i32 = arith.constant 0 : i32
    %c0_i32_0 = arith.constant 0 : i32
    %c0_i32_1 = arith.constant 0 : i32
    return %c0_i32, %c0_i32_0 : i32, i32
  }
  func.func @transform_9(%arg0: i32) -> (i32, i32) {
    %c0_i32 = arith.constant 0 : i32
    %c0_i32_0 = arith.constant 0 : i32
    return %c0_i32, %arg0 : i32, i32
  }
}

</mosaic_0001>

<llo_original>
// kernel: critic_adv_forward.1
$region0: #{critic_adv_forward.1}
  #allocation0 [shape = 'u32[]', space=smem, size = 0x4, offset = 0x4, fixed_abs, tag = 'smem constant byte address 0x4 - core index']
  #allocation1 [shape = 'u32[144,128]{1,0:T(1,128)}', space=vmem, size = 0x12000, scoped, tag = 'internal scratch']
  #allocation2 [shape = 'f32[1,1]{1,0:T(1,128)S(6)}', space=smem, size = 0x200, scoped, tag = 'scoped memory for critic_adv_forward.1']
  %s0 = inlined_call_operand.vmem [shape: bf16[384,32], index: 0, kind: input, shape index: {}]
  %s1 = inlined_call_operand.vmem [shape: bf16[48,32], index: 1, kind: input, shape index: {}]
  %s2 = inlined_call_operand.vmem [shape: f32[48,1], index: 2, kind: input, shape index: {}]
  %s3 = inlined_call_operand.vmem [shape: bf16[48,48], index: 3, kind: input, shape index: {}]
  %s4 = inlined_call_operand.vmem [shape: f32[48,1], index: 4, kind: input, shape index: {}]
  %s5 = inlined_call_operand.vmem [shape: bf16[48,48], index: 5, kind: input, shape index: {}]
  %s6 = inlined_call_operand.vmem [shape: f32[48,1], index: 6, kind: input, shape index: {}]
  %s7 = inlined_call_operand.vmem [shape: f32[48,1], index: 7, kind: input, shape index: {}]
  %s8 = inlined_call_operand.<no memory space> [shape: f32[1,1], index: 8, kind: input, shape index: {}]
  %s9 = inlined_call_operand.vmem [shape: f32[1,384], index: 9, kind: output, shape index: {}]
  %s10 = sld [smem:[#allocation0]]
  $region46: #{critic_adv_forward.1} parent=0
    _
  %s12 = ssub.s32 1, %s10
  %s13 = scalar_select 0, %s12, %s10
  %14 = sst [smem:[#allocation2]] %s8
  // Predicated region
  $region2: #{critic_adv_forward.1} parent=0 // pred_check
    _
  $region3: #{critic_adv_forward.1} parent=0 // pred_check_branch
    %16 = sbr.rel (0) target = $region5
  $region4: #{critic_adv_forward.1} parent=0 // pred_region
    _
  $region5: #{critic_adv_forward.1} parent=0 // pred_fallthru
    _
  // Predicated region
  $region6: #{critic_adv_forward.1} parent=0 // pred_check
    _
  $region7: #{critic_adv_forward.1} parent=0 // pred_check_branch
    %18 = sbr.rel (0) target = $region9
  $region8: #{critic_adv_forward.1} parent=0 // pred_region
    _
  $region9: #{critic_adv_forward.1} parent=0 // pred_fallthru
    _
  // Predicated region
  $region10: #{critic_adv_forward.1} parent=0 // pred_check
    _
  $region11: #{critic_adv_forward.1} parent=0 // pred_check_branch
    %20 = sbr.rel (0) target = $region13
  $region12: #{critic_adv_forward.1} parent=0 // pred_region
    _
  $region13: #{critic_adv_forward.1} parent=0 // pred_fallthru
    _
  // Predicated region
  $region14: #{critic_adv_forward.1} parent=0 // pred_check
    _
  $region15: #{critic_adv_forward.1} parent=0 // pred_check_branch
    %22 = sbr.rel (0) target = $region17
  $region16: #{critic_adv_forward.1} parent=0 // pred_region
    _
  $region17: #{critic_adv_forward.1} parent=0 // pred_fallthru
    _
  // Predicated region
  $region18: #{critic_adv_forward.1} parent=0 // pred_check
    _
  $region19: #{critic_adv_forward.1} parent=0 // pred_check_branch
    %24 = sbr.rel (0) target = $region21
  $region20: #{critic_adv_forward.1} parent=0 // pred_region
    _
  $region21: #{critic_adv_forward.1} parent=0 // pred_fallthru
    _
  // Predicated region
  $region22: #{critic_adv_forward.1} parent=0 // pred_check
    _
  $region23: #{critic_adv_forward.1} parent=0 // pred_check_branch
    %26 = sbr.rel (0) target = $region25
  $region24: #{critic_adv_forward.1} parent=0 // pred_region
    _
  $region25: #{critic_adv_forward.1} parent=0 // pred_fallthru
    _
  // Predicated region
  $region26: #{critic_adv_forward.1} parent=0 // pred_check
    _
  $region27: #{critic_adv_forward.1} parent=0 // pred_check_branch
    %28 = sbr.rel (0) target = $region29
  $region28: #{critic_adv_forward.1} parent=0 // pred_region
    _
  $region29: #{critic_adv_forward.1} parent=0 // pred_fallthru
    _
  // Predicated region
  $region30: #{critic_adv_forward.1} parent=0 // pred_check
    _
  $region31: #{critic_adv_forward.1} parent=0 // pred_check_branch
    %30 = sbr.rel (0) target = $region33
  $region32: #{critic_adv_forward.1} parent=0 // pred_region
    _
  $region33: #{critic_adv_forward.1} parent=0 // pred_fallthru
    _
  // Predicated region
  $region34: #{critic_adv_forward.1} parent=0 // pred_check
    _
  $region35: #{critic_adv_forward.1} parent=0 // pred_check_branch
    %32 = sbr.rel (0) target = $region37
  $region36: #{critic_adv_forward.1} parent=0 // pred_region
    _
  $region37: #{critic_adv_forward.1} parent=0 // pred_fallthru
    _
  %v34 = vld [vmem:[%s1] sm:$0xf]
  %v35 = vld [vmem:[%s1 + $0x4] sm:$0xf]
  %v36 = vld [vmem:[%s1 + $0x8] sm:$0xf]
  %v37 = vld [vmem:[%s1 + $0xc] sm:$0xf]
  %v38 = vld [vmem:[%s1 + $0x10] sm:$0xf]
  %v39 = vld [vmem:[%s1 + $0x14] sm:$0xf]
  %v40 = vld [vmem:[%s0] sm:$0xf]
  %v41 = vld [vmem:[%s0 + $0x4] sm:$0xf]
  %v42 = vld [vmem:[%s0 + $0x8] sm:$0xf]
  %v43 = vld [vmem:[%s0 + $0xc] sm:$0xf]
  %v44 = vld [vmem:[%s0 + $0x10] sm:$0xf]
  %v45 = vld [vmem:[%s0 + $0x14] sm:$0xf]
  %v46 = vld [vmem:[%s0 + $0x18] sm:$0xf]
  %v47 = vld [vmem:[%s0 + $0x1c] sm:$0xf]
  %v48 = vld [vmem:[%s0 + $0x20] sm:$0xf]
  %v49 = vld [vmem:[%s0 + $0x24] sm:$0xf]
  %v50 = vld [vmem:[%s0 + $0x28] sm:$0xf]
  %v51 = vld [vmem:[%s0 + $0x2c] sm:$0xf]
  %v52 = vld [vmem:[%s0 + $0x30] sm:$0xf]
  %v53 = vld [vmem:[%s0 + $0x34] sm:$0xf]
  %v54 = vld [vmem:[%s0 + $0x38] sm:$0xf]
  %v55 = vld [vmem:[%s0 + $0x3c] sm:$0xf]
  %v56 = vld [vmem:[%s0 + $0x40] sm:$0xf]
  %v57 = vld [vmem:[%s0 + $0x44] sm:$0xf]
  %v58 = vld [vmem:[%s0 + $0x48] sm:$0xf]
  %v59 = vld [vmem:[%s0 + $0x4c] sm:$0xf]
  %v60 = vld [vmem:[%s0 + $0x50] sm:$0xf]
  %v61 = vld [vmem:[%s0 + $0x54] sm:$0xf]
  %v62 = vld [vmem:[%s0 + $0x58] sm:$0xf]
  %v63 = vld [vmem:[%s0 + $0x5c] sm:$0xf]
  %v64 = vld [vmem:[%s0 + $0x60] sm:$0xf]
  %v65 = vld [vmem:[%s0 + $0x64] sm:$0xf]
  %v66 = vld [vmem:[%s0 + $0x68] sm:$0xf]
  %v67 = vld [vmem:[%s0 + $0x6c] sm:$0xf]
  %v68 = vld [vmem:[%s0 + $0x70] sm:$0xf]
  %v69 = vld [vmem:[%s0 + $0x74] sm:$0xf]
  %v70 = vld [vmem:[%s0 + $0x78] sm:$0xf]
  %v71 = vld [vmem:[%s0 + $0x7c] sm:$0xf]
  %v72 = vld [vmem:[%s0 + $0x80] sm:$0xf]
  %v73 = vld [vmem:[%s0 + $0x84] sm:$0xf]
  %v74 = vld [vmem:[%s0 + $0x88] sm:$0xf]
  %v75 = vld [vmem:[%s0 + $0x8c] sm:$0xf]
  %v76 = vld [vmem:[%s0 + $0x90] sm:$0xf]
  %v77 = vld [vmem:[%s0 + $0x94] sm:$0xf]
  %v78 = vld [vmem:[%s0 + $0x98] sm:$0xf]
  %v79 = vld [vmem:[%s0 + $0x9c] sm:$0xf]
  %v80 = vld [vmem:[%s0 + $0xa0] sm:$0xf]
  %v81 = vld [vmem:[%s0 + $0xa4] sm:$0xf]
  %v82 = vld [vmem:[%s0 + $0xa8] sm:$0xf]
  %v83 = vld [vmem:[%s0 + $0xac] sm:$0xf]
  %v84 = vld [vmem:[%s0 + $0xb0] sm:$0xf]
  %v85 = vld [vmem:[%s0 + $0xb4] sm:$0xf]
  %v86 = vld [vmem:[%s0 + $0xb8] sm:$0xf]
  %v87 = vld [vmem:[%s0 + $0xbc] sm:$0xf]
  %v88 = vld [vmem:[%s2] sm:$0xff]
  %v89 = vld [vmem:[%s2 + $0x8] sm:$0xff]
  %v90 = vld [vmem:[%s2 + $0x10] sm:$0xff]
  %v91 = vld [vmem:[%s2 + $0x18] sm:$0xff]
  %v92 = vld [vmem:[%s2 + $0x20] sm:$0xff]
  %v93 = vld [vmem:[%s2 + $0x28] sm:$0xff]
  %95 = vset.pattern.permute.xlu0 0
  %96 = vperm.xlu0 %95, %v88
  %v97 = vpop.permute.xlu0 %96
  %100 = vset.pattern.permute.xlu0 0
  %101 = vperm.xlu0 %100, %v89
  %v102 = vpop.permute.xlu0 %101
  %105 = vset.pattern.permute.xlu0 0
  %106 = vperm.xlu0 %105, %v90
  %v107 = vpop.permute.xlu0 %106
  %110 = vset.pattern.permute.xlu0 0
  %111 = vperm.xlu0 %110, %v91
  %v112 = vpop.permute.xlu0 %111
  %115 = vset.pattern.permute.xlu0 0
  %116 = vperm.xlu0 %115, %v92
  %v117 = vpop.permute.xlu0 %116
  %120 = vset.pattern.permute.xlu0 0
  %121 = vperm.xlu0 %120, %v93
  %v122 = vpop.permute.xlu0 %121
  %v130 = vunpack.c.l.b16 %v34
  %v131 = vunpack.c.l.b16 %v35
  %v132 = vunpack.c.l.b16 %v36
  %v133 = vunpack.c.l.b16 %v37
  %v134 = vunpack.c.l.b16 %v38
  %v135 = vunpack.c.l.b16 %v39
  %v136 = vpack.c.b16 %v131, %v130
  %v137 = vpack.c.b16 %v133, %v132
  %v138 = vpack.c.b16 %v135, %v134
  %v187 = vunpack.c.l.b16 %v40
  %v188 = vunpack.c.l.b16 %v41
  %v189 = vunpack.c.l.b16 %v42
  %v190 = vunpack.c.l.b16 %v43
  %v191 = vunpack.c.l.b16 %v44
  %v192 = vunpack.c.l.b16 %v45
  %v193 = vunpack.c.l.b16 %v46
  %v194 = vunpack.c.l.b16 %v47
  %v195 = vunpack.c.l.b16 %v48
  %v196 = vunpack.c.l.b16 %v49
  %v197 = vunpack.c.l.b16 %v50
  %v198 = vunpack.c.l.b16 %v51
  %v199 = vunpack.c.l.b16 %v52
  %v200 = vunpack.c.l.b16 %v53
  %v201 = vunpack.c.l.b16 %v54
  %v202 = vunpack.c.l.b16 %v55
  %v203 = vunpack.c.l.b16 %v56
  %v204 = vunpack.c.l.b16 %v57
  %v205 = vunpack.c.l.b16 %v58
  %v206 = vunpack.c.l.b16 %v59
  %v207 = vunpack.c.l.b16 %v60
  %v208 = vunpack.c.l.b16 %v61
  %v209 = vunpack.c.l.b16 %v62
  %v210 = vunpack.c.l.b16 %v63
  %v211 = vunpack.c.l.b16 %v64
  %v212 = vunpack.c.l.b16 %v65
  %v213 = vunpack.c.l.b16 %v66
  %v214 = vunpack.c.l.b16 %v67
  %v215 = vunpack.c.l.b16 %v68
  %v216 = vunpack.c.l.b16 %v69
  %v217 = vunpack.c.l.b16 %v70
  %v218 = vunpack.c.l.b16 %v71
  %v219 = vunpack.c.l.b16 %v72
  %v220 = vunpack.c.l.b16 %v73
  %v221 = vunpack.c.l.b16 %v74
  %v222 = vunpack.c.l.b16 %v75
  %v223 = vunpack.c.l.b16 %v76
  %v224 = vunpack.c.l.b16 %v77
  %v225 = vunpack.c.l.b16 %v78
  %v226 = vunpack.c.l.b16 %v79
  %v227 = vunpack.c.l.b16 %v80
  %v228 = vunpack.c.l.b16 %v81
  %v229 = vunpack.c.l.b16 %v82
  %v230 = vunpack.c.l.b16 %v83
  %v231 = vunpack.c.l.b16 %v84
  %v232 = vunpack.c.l.b16 %v85
  %v233 = vunpack.c.l.b16 %v86
  %v234 = vunpack.c.l.b16 %v87
  %v235 = vpack.c.b16 %v188, %v187
  %v236 = vpack.c.b16 %v190, %v189
  %v237 = vpack.c.b16 %v192, %v191
  %v238 = vpack.c.b16 %v194, %v193
  %v239 = vpack.c.b16 %v196, %v195
  %v240 = vpack.c.b16 %v198, %v197
  %v241 = vpack.c.b16 %v200, %v199
  %v242 = vpack.c.b16 %v202, %v201
  %v243 = vpack.c.b16 %v204, %v203
  %v244 = vpack.c.b16 %v206, %v205
  %v245 = vpack.c.b16 %v208, %v207
  %v246 = vpack.c.b16 %v210, %v209
  %v247 = vpack.c.b16 %v212, %v211
  %v248 = vpack.c.b16 %v214, %v213
  %v249 = vpack.c.b16 %v216, %v215
  %v250 = vpack.c.b16 %v218, %v217
  %v251 = vpack.c.b16 %v220, %v219
  %v252 = vpack.c.b16 %v222, %v221
  %v253 = vpack.c.b16 %v224, %v223
  %v254 = vpack.c.b16 %v226, %v225
  %v255 = vpack.c.b16 %v228, %v227
  %v256 = vpack.c.b16 %v230, %v229
  %v257 = vpack.c.b16 %v232, %v231
  %v258 = vpack.c.b16 %v234, %v233
  %vm259 = vcmask 261120
  %v261 = vsel %vm259, %v136, 0
  %v264 = vsel %vm259, %v137, 0
  %v267 = vsel %vm259, %v138, 0
  %v270 = vsel %vm259, %v235, 0
  %v273 = vsel %vm259, %v236, 0
  %v276 = vsel %vm259, %v237, 0
  %v279 = vsel %vm259, %v238, 0
  %v282 = vsel %vm259, %v239, 0
  %v285 = vsel %vm259, %v240, 0
  %v288 = vsel %vm259, %v241, 0
  %v291 = vsel %vm259, %v242, 0
  %v294 = vsel %vm259, %v243, 0
  %v297 = vsel %vm259, %v244, 0
  %v300 = vsel %vm259, %v245, 0
  %v303 = vsel %vm259, %v246, 0
  %v306 = vsel %vm259, %v247, 0
  %v309 = vsel %vm259, %v248, 0
  %v312 = vsel %vm259, %v249, 0
  %v315 = vsel %vm259, %v250, 0
  %v318 = vsel %vm259, %v251, 0
  %v321 = vsel %vm259, %v252, 0
  %v324 = vsel %vm259, %v253, 0
  %v327 = vsel %vm259, %v254, 0
  %v330 = vsel %vm259, %v255, 0
  %v333 = vsel %vm259, %v256, 0
  %v336 = vsel %vm259, %v257, 0
  %v339 = vsel %vm259, %v258, 0
  %341 = vmatprep.subr.bf16.mxu0 0
  %342 = vmatpush1.bf16.xpose.msra.mxu0 %v291
  %343 = vmatprep.subr.bf16.mxu0 0
  %344 = vmatpush1.bf16.xpose.msra.mxu0 %v288
  %345 = vmatprep.subr.bf16.mxu0 0
  %346 = vmatpush1.bf16.xpose.msra.mxu0 %v285
  %347 = vmatprep.subr.bf16.mxu0 0
  %348 = vmatpush1.bf16.xpose.msra.mxu0 %v282
  %349 = vmatprep.subr.bf16.mxu0 0
  %350 = vmatpush1.bf16.xpose.msra.mxu0 %v279
  %351 = vmatprep.subr.bf16.mxu0 0
  %352 = vmatpush1.bf16.xpose.msra.mxu0 %v276
  %353 = vmatprep.subr.bf16.mxu0 0
  %354 = vmatpush1.bf16.xpose.msra.mxu0 %v273
  %355 = vmatprep.subr.bf16.mxu0 0
  %356 = vmatpush1.bf16.xpose.msra.mxu0 %v270
  %357 = vmatprep.subr.bf16.mxu0 0
  %358 = vmatpush2.bf16.xpose.msra.mxu0 %v315
  %359 = vmatprep.subr.bf16.mxu0 0
  %360 = vmatpush2.bf16.xpose.msra.mxu0 %v312
  %361 = vmatprep.subr.bf16.mxu0 0
  %362 = vmatpush2.bf16.xpose.msra.mxu0 %v309
  %363 = vmatprep.subr.bf16.mxu0 0
  %364 = vmatpush2.bf16.xpose.msra.mxu0 %v306
  %365 = vmatprep.subr.bf16.mxu0 0
  %366 = vmatpush2.bf16.xpose.msra.mxu0 %v303
  %367 = vmatprep.subr.bf16.mxu0 0
  %368 = vmatpush2.bf16.xpose.msra.mxu0 %v300
  %369 = vmatprep.subr.bf16.mxu0 0
  %370 = vmatpush2.bf16.xpose.msra.mxu0 %v297
  %371 = vmatprep.subr.bf16.mxu0 0
  %372 = vmatpush2.bf16.xpose.msra.mxu0 %v294
  %373 = vmatprep.mubr.bf16.mxu0 0
  %374 = vmatmul.mubr.bf16.gmra.mxu0 %v261
  %v375 = vpop.f32.mrf.mxu0
  %v376 = vadd.f32 %v97, %v375
  %v377 = vpop.f32.mrf.mxu0
  %v378 = vadd.f32 %v97, %v377
  %v379 = vpop.f32.mrf.mxu0
  %v380 = vadd.f32 %v102, %v379
  %v381 = vpop.f32.mrf.mxu0
  %v382 = vadd.f32 %v102, %v381
  %383 = vmatprep.mubr.bf16.mxu0 0
  %384 = vmatmul.mubr.bf16.gmra.mxu0 %v264
  %v385 = vpop.f32.mrf.mxu0
  %v386 = vadd.f32 %v107, %v385
  %v387 = vpop.f32.mrf.mxu0
  %v388 = vadd.f32 %v107, %v387
  %v389 = vpop.f32.mrf.mxu0
  %v390 = vadd.f32 %v112, %v389
  %v391 = vpop.f32.mrf.mxu0
  %v392 = vadd.f32 %v112, %v391
  %393 = vmatprep.mubr.bf16.mxu0 0
  %394 = vmatmul.mubr.bf16.gmra.mxu0 %v267
  %v395 = vpop.f32.mrf.mxu0
  %v396 = vadd.f32 %v117, %v395
  %v397 = vpop.f32.mrf.mxu0
  %v398 = vadd.f32 %v117, %v397
  %v399 = vpop.f32.mrf.mxu0
  %v400 = vadd.f32 %v122, %v399
  %v401 = vpop.f32.mrf.mxu0
  %v402 = vadd.f32 %v122, %v401
  %403 = vdwg.mxu0
  %404 = vmatprep.subr.bf16.mxu0 0
  %405 = vmatpush1.bf16.xpose.msra.mxu0 %v339
  %406 = vmatprep.subr.bf16.mxu0 0
  %407 = vmatpush1.bf16.xpose.msra.mxu0 %v336
  %408 = vmatprep.subr.bf16.mxu0 0
  %409 = vmatpush1.bf16.xpose.msra.mxu0 %v333
  %410 = vmatprep.subr.bf16.mxu0 0
  %411 = vmatpush1.bf16.xpose.msra.mxu0 %v330
  %412 = vmatprep.subr.bf16.mxu0 0
  %413 = vmatpush1.bf16.xpose.msra.mxu0 %v327
  %414 = vmatprep.subr.bf16.mxu0 0
  %415 = vmatpush1.bf16.xpose.msra.mxu0 %v324
  %416 = vmatprep.subr.bf16.mxu0 0
  %417 = vmatpush1.bf16.xpose.msra.mxu0 %v321
  %418 = vmatprep.subr.bf16.mxu0 0
  %419 = vmatpush1.bf16.xpose.msra.mxu0 %v318
  %420 = vmatprep.subr.bf16.mxu0 0
  %421 = vmatpush2.bf16.xpose.msra.mxu0 0
  %422 = vmatprep.subr.bf16.mxu0 0
  %423 = vmatpush2.bf16.xpose.msra.mxu0 0
  %424 = vmatprep.subr.bf16.mxu0 0
  %425 = vmatpush2.bf16.xpose.msra.mxu0 0
  %426 = vmatprep.subr.bf16.mxu0 0
  %427 = vmatpush2.bf16.xpose.msra.mxu0 0
  %428 = vmatprep.subr.bf16.mxu0 0
  %429 = vmatpush2.bf16.xpose.msra.mxu0 0
  %430 = vmatprep.subr.bf16.mxu0 0
  %431 = vmatpush2.bf16.xpose.msra.mxu0 0
  %432 = vmatprep.subr.bf16.mxu0 0
  %433 = vmatpush2.bf16.xpose.msra.mxu0 0
  %434 = vmatprep.subr.bf16.mxu0 0
  %435 = vmatpush2.bf16.xpose.msra.mxu0 0
  %436 = vmatprep.mubr.bf16.mxu0 0
  %437 = vmatmul.mubr.bf16.gmra.mxu0 %v261
  %v438 = vpop.f32.mrf.mxu0
  %v439 = vadd.f32 %v97, %v438
  %v440 = vpop.f32.mrf.mxu0
  %v441 = vpop.f32.mrf.mxu0
  %v442 = vadd.f32 %v102, %v441
  %v443 = vpop.f32.mrf.mxu0
  %444 = vmatprep.mubr.bf16.mxu0 0
  %445 = vmatmul.mubr.bf16.gmra.mxu0 %v264
  %v446 = vpop.f32.mrf.mxu0
  %v447 = vadd.f32 %v107, %v446
  %v448 = vpop.f32.mrf.mxu0
  %v449 = vpop.f32.mrf.mxu0
  %v450 = vadd.f32 %v112, %v449
  %v451 = vpop.f32.mrf.mxu0
  %452 = vmatprep.mubr.bf16.mxu0 0
  %453 = vmatmul.mubr.bf16.gmra.mxu0 %v267
  %v454 = vpop.f32.mrf.mxu0
  %v455 = vadd.f32 %v117, %v454
  %v456 = vpop.f32.mrf.mxu0
  %v457 = vpop.f32.mrf.mxu0
  %v458 = vadd.f32 %v122, %v457
  %v459 = vpop.f32.mrf.mxu0
  %460 = vdwg.mxu0
  %v461 = vmax.f32 %v376, 0.0
  %v462 = vmax.f32 %v378, 0.0
  %v463 = vmax.f32 %v439, 0.0
  %v464 = vmax.f32 %v380, 0.0
  %v465 = vmax.f32 %v382, 0.0
  %v466 = vmax.f32 %v442, 0.0
  %v467 = vmax.f32 %v386, 0.0
  %v468 = vmax.f32 %v388, 0.0
  %v469 = vmax.f32 %v447, 0.0
  %v470 = vmax.f32 %v390, 0.0
  %v471 = vmax.f32 %v392, 0.0
  %v472 = vmax.f32 %v450, 0.0
  %v473 = vmax.f32 %v396, 0.0
  %v474 = vmax.f32 %v398, 0.0
  %v475 = vmax.f32 %v455, 0.0
  %v476 = vmax.f32 %v400, 0.0
  %v477 = vmax.f32 %v402, 0.0
  %v478 = vmax.f32 %v458, 0.0
  %v479 = vld [vmem:[%s3] sm:$0xf]
  %v480 = vld [vmem:[%s3 + $0x4] sm:$0xf]
  %v481 = vld [vmem:[%s3 + $0x8] sm:$0xf]
  %v482 = vld [vmem:[%s3 + $0xc] sm:$0xf]
  %v483 = vld [vmem:[%s3 + $0x10] sm:$0xf]
  %v484 = vld [vmem:[%s3 + $0x14] sm:$0xf]
  %v485 = vpack.c.bf16 %v464, %v461
  %v486 = vpack.c.bf16 %v465, %v462
  %v487 = vpack.c.bf16 %v466, %v463
  %v488 = vpack.c.bf16 %v470, %v467
  %v489 = vpack.c.bf16 %v471, %v468
  %v490 = vpack.c.bf16 %v472, %v469
  %v491 = vpack.c.bf16 %v476, %v473
  %v492 = vpack.c.bf16 %v477, %v474
  %v493 = vpack.c.bf16 %v478, %v475
  %v494 = vld [vmem:[%s4] sm:$0xff]
  %v495 = vld [vmem:[%s4 + $0x8] sm:$0xff]
  %v496 = vld [vmem:[%s4 + $0x10] sm:$0xff]
  %v497 = vld [vmem:[%s4 + $0x18] sm:$0xff]
  %v498 = vld [vmem:[%s4 + $0x20] sm:$0xff]
  %v499 = vld [vmem:[%s4 + $0x28] sm:$0xff]
  %501 = vset.pattern.permute.xlu0 0
  %502 = vperm.xlu0 %501, %v494
  %v503 = vpop.permute.xlu0 %502
  %506 = vset.pattern.permute.xlu0 0
  %507 = vperm.xlu0 %506, %v495
  %v508 = vpop.permute.xlu0 %507
  %511 = vset.pattern.permute.xlu0 0
  %512 = vperm.xlu0 %511, %v496
  %v513 = vpop.permute.xlu0 %512
  %516 = vset.pattern.permute.xlu0 0
  %517 = vperm.xlu0 %516, %v497
  %v518 = vpop.permute.xlu0 %517
  %521 = vset.pattern.permute.xlu0 0
  %522 = vperm.xlu0 %521, %v498
  %v523 = vpop.permute.xlu0 %522
  %526 = vset.pattern.permute.xlu0 0
  %527 = vperm.xlu0 %526, %v499
  %v528 = vpop.permute.xlu0 %527
  %v536 = vunpack.c.l.b16 %v479
  %v537 = vunpack.c.l.b16 %v480
  %v538 = vunpack.c.l.b16 %v481
  %v539 = vunpack.c.l.b16 %v482
  %v540 = vunpack.c.l.b16 %v483
  %v541 = vunpack.c.l.b16 %v484
  %v542 = vpack.c.b16 %v537, %v536
  %v543 = vpack.c.b16 %v539, %v538
  %v544 = vpack.c.b16 %v541, %v540
  %vm545 = vcmask 392192
  %v547 = vsel %vm545, %v542, 0
  %v550 = vsel %vm545, %v543, 0
  %v553 = vsel %vm545, %v544, 0
  %555 = vmatprep.subr.bf16.mxu0 0
  %556 = vmatpush1.bf16.msra.mxu0 0
  %557 = vmatprep.subr.bf16.mxu0 0
  %558 = vmatpush1.bf16.msra.mxu0 0
  %559 = vmatprep.subr.bf16.mxu0 0
  %560 = vmatpush1.bf16.msra.mxu0 0
  %561 = vmatprep.subr.bf16.mxu0 0
  %562 = vmatpush1.bf16.msra.mxu0 0
  %563 = vmatprep.subr.bf16.mxu0 0
  %564 = vmatpush1.bf16.msra.mxu0 0
  %565 = vmatprep.subr.bf16.mxu0 %v492
  %566 = vmatpush1.bf16.msra.mxu0 %v491
  %567 = vmatprep.subr.bf16.mxu0 %v489
  %568 = vmatpush1.bf16.msra.mxu0 %v488
  %569 = vmatprep.subr.bf16.mxu0 %v486
  %570 = vmatpush1.bf16.msra.mxu0 %v485
  %571 = vmatprep.subr.bf16.mxu0 0
  %572 = vmatpush2.bf16.msra.mxu0 0
  %573 = vmatprep.subr.bf16.mxu0 0
  %574 = vmatpush2.bf16.msra.mxu0 0
  %575 = vmatprep.subr.bf16.mxu0 0
  %576 = vmatpush2.bf16.msra.mxu0 0
  %577 = vmatprep.subr.bf16.mxu0 0
  %578 = vmatpush2.bf16.msra.mxu0 0
  %579 = vmatprep.subr.bf16.mxu0 0
  %580 = vmatpush2.bf16.msra.mxu0 0
  %581 = vmatprep.subr.bf16.mxu0 0
  %582 = vmatpush2.bf16.msra.mxu0 0
  %583 = vmatprep.subr.bf16.mxu0 0
  %584 = vmatpush2.bf16.msra.mxu0 0
  %585 = vmatprep.subr.bf16.mxu0 0
  %586 = vmatpush2.bf16.msra.mxu0 0
  %587 = vmatprep.mubr.bf16.mxu0 0
  %588 = vmatmul.mubr.bf16.gmra.mxu0 %v547
  %v589 = vpop.f32.mrf.mxu0
  %v590 = vadd.f32 %v503, %v589
  %v591 = vpop.f32.mrf.mxu0
  %v592 = vadd.f32 %v503, %v591
  %v593 = vpop.f32.mrf.mxu0
  %v594 = vadd.f32 %v508, %v593
  %v595 = vpop.f32.mrf.mxu0
  %v596 = vadd.f32 %v508, %v595
  %597 = vmatprep.mubr.bf16.mxu0 0
  %598 = vmatmul.mubr.bf16.gmra.mxu0 %v550
  %v599 = vpop.f32.mrf.mxu0
  %v600 = vadd.f32 %v513, %v599
  %v601 = vpop.f32.mrf.mxu0
  %v602 = vadd.f32 %v513, %v601
  %v603 = vpop.f32.mrf.mxu0
  %v604 = vadd.f32 %v518, %v603
  %v605 = vpop.f32.mrf.mxu0
  %v606 = vadd.f32 %v518, %v605
  %607 = vmatprep.mubr.bf16.mxu0 0
  %608 = vmatmul.mubr.bf16.gmra.mxu0 %v553
  %v609 = vpop.f32.mrf.mxu0
  %v610 = vadd.f32 %v523, %v609
  %v611 = vpop.f32.mrf.mxu0
  %v612 = vadd.f32 %v523, %v611
  %v613 = vpop.f32.mrf.mxu0
  %v614 = vadd.f32 %v528, %v613
  %v615 = vpop.f32.mrf.mxu0
  %v616 = vadd.f32 %v528, %v615
  %617 = vdwg.mxu0
  %618 = vmatprep.subr.bf16.mxu0 0
  %619 = vmatpush1.bf16.msra.mxu0 0
  %620 = vmatprep.subr.bf16.mxu0 0
  %621 = vmatpush1.bf16.msra.mxu0 0
  %622 = vmatprep.subr.bf16.mxu0 0
  %623 = vmatpush1.bf16.msra.mxu0 0
  %624 = vmatprep.subr.bf16.mxu0 0
  %625 = vmatpush1.bf16.msra.mxu0 0
  %626 = vmatprep.subr.bf16.mxu0 0
  %627 = vmatpush1.bf16.msra.mxu0 0
  %628 = vmatprep.subr.bf16.mxu0 0
  %629 = vmatpush1.bf16.msra.mxu0 %v493
  %630 = vmatprep.subr.bf16.mxu0 0
  %631 = vmatpush1.bf16.msra.mxu0 %v490
  %632 = vmatprep.subr.bf16.mxu0 0
  %633 = vmatpush1.bf16.msra.mxu0 %v487
  %634 = vmatprep.subr.bf16.mxu0 0
  %635 = vmatpush2.bf16.msra.mxu0 0
  %636 = vmatprep.subr.bf16.mxu0 0
  %637 = vmatpush2.bf16.msra.mxu0 0
  %638 = vmatprep.subr.bf16.mxu0 0
  %639 = vmatpush2.bf16.msra.mxu0 0
  %640 = vmatprep.subr.bf16.mxu0 0
  %641 = vmatpush2.bf16.msra.mxu0 0
  %642 = vmatprep.subr.bf16.mxu0 0
  %643 = vmatpush2.bf16.msra.mxu0 0
  %644 = vmatprep.subr.bf16.mxu0 0
  %645 = vmatpush2.bf16.msra.mxu0 0
  %646 = vmatprep.subr.bf16.mxu0 0
  %647 = vmatpush2.bf16.msra.mxu0 0
  %648 = vmatprep.subr.bf16.mxu0 0
  %649 = vmatpush2.bf16.msra.mxu0 0
  %650 = vmatprep.mubr.bf16.mxu0 0
  %651 = vmatmul.mubr.bf16.gmra.mxu0 %v547
  %v652 = vpop.f32.mrf.mxu0
  %v653 = vadd.f32 %v503, %v652
  %v654 = vpop.f32.mrf.mxu0
  %v655 = vpop.f32.mrf.mxu0
  %v656 = vadd.f32 %v508, %v655
  %v657 = vpop.f32.mrf.mxu0
  %658 = vmatprep.mubr.bf16.mxu0 0
  %659 = vmatmul.mubr.bf16.gmra.mxu0 %v550
  %v660 = vpop.f32.mrf.mxu0
  %v661 = vadd.f32 %v513, %v660
  %v662 = vpop.f32.mrf.mxu0
  %v663 = vpop.f32.mrf.mxu0
  %v664 = vadd.f32 %v518, %v663
  %v665 = vpop.f32.mrf.mxu0
  %666 = vmatprep.mubr.bf16.mxu0 0
  %667 = vmatmul.mubr.bf16.gmra.mxu0 %v553
  %v668 = vpop.f32.mrf.mxu0
  %v669 = vadd.f32 %v523, %v668
  %v670 = vpop.f32.mrf.mxu0
  %v671 = vpop.f32.mrf.mxu0
  %v672 = vadd.f32 %v528, %v671
  %v673 = vpop.f32.mrf.mxu0
  %674 = vdwg.mxu0
  %v675 = vadd.f32 %v590, 3.0
  %v676 = vadd.f32 %v592, 3.0
  %v677 = vadd.f32 %v653, 3.0
  %v678 = vadd.f32 %v594, 3.0
  %v679 = vadd.f32 %v596, 3.0
  %v680 = vadd.f32 %v656, 3.0
  %v681 = vadd.f32 %v600, 3.0
  %v682 = vadd.f32 %v602, 3.0
  %v683 = vadd.f32 %v661, 3.0
  %v684 = vadd.f32 %v604, 3.0
  %v685 = vadd.f32 %v606, 3.0
  %v686 = vadd.f32 %v664, 3.0
  %v687 = vadd.f32 %v610, 3.0
  %v688 = vadd.f32 %v612, 3.0
  %v689 = vadd.f32 %v669, 3.0
  %v690 = vadd.f32 %v614, 3.0
  %v691 = vadd.f32 %v616, 3.0
  %v692 = vadd.f32 %v672, 3.0
  %v693 = vmax.f32 %v675, 0.0
  %v694 = vmax.f32 %v676, 0.0
  %v695 = vmax.f32 %v677, 0.0
  %v696 = vmax.f32 %v678, 0.0
  %v697 = vmax.f32 %v679, 0.0
  %v698 = vmax.f32 %v680, 0.0
  %v699 = vmax.f32 %v681, 0.0
  %v700 = vmax.f32 %v682, 0.0
  %v701 = vmax.f32 %v683, 0.0
  %v702 = vmax.f32 %v684, 0.0
  %v703 = vmax.f32 %v685, 0.0
  %v704 = vmax.f32 %v686, 0.0
  %v705 = vmax.f32 %v687, 0.0
  %v706 = vmax.f32 %v688, 0.0
  %v707 = vmax.f32 %v689, 0.0
  %v708 = vmax.f32 %v690, 0.0
  %v709 = vmax.f32 %v691, 0.0
  %v710 = vmax.f32 %v692, 0.0
  %v711 = vmin.f32 %v693, 6.0
  %v712 = vmin.f32 %v694, 6.0
  %v713 = vmin.f32 %v695, 6.0
  %v714 = vmin.f32 %v696, 6.0
  %v715 = vmin.f32 %v697, 6.0
  %v716 = vmin.f32 %v698, 6.0
  %v717 = vmin.f32 %v699, 6.0
  %v718 = vmin.f32 %v700, 6.0
  %v719 = vmin.f32 %v701, 6.0
  %v720 = vmin.f32 %v702, 6.0
  %v721 = vmin.f32 %v703, 6.0
  %v722 = vmin.f32 %v704, 6.0
  %v723 = vmin.f32 %v705, 6.0
  %v724 = vmin.f32 %v706, 6.0
  %v725 = vmin.f32 %v707, 6.0
  %v726 = vmin.f32 %v708, 6.0
  %v727 = vmin.f32 %v709, 6.0
  %v728 = vmin.f32 %v710, 6.0
  %v729 = vmul.f32 %v590, %v711
  %v730 = vmul.f32 %v592, %v712
  %v731 = vmul.f32 %v653, %v713
  %v732 = vmul.f32 %v594, %v714
  %v733 = vmul.f32 %v596, %v715
  %v734 = vmul.f32 %v656, %v716
  %v735 = vmul.f32 %v600, %v717
  %v736 = vmul.f32 %v602, %v718
  %v737 = vmul.f32 %v661, %v719
  %v738 = vmul.f32 %v604, %v720
  %v739 = vmul.f32 %v606, %v721
  %v740 = vmul.f32 %v664, %v722
  %v741 = vmul.f32 %v610, %v723
  %v742 = vmul.f32 %v612, %v724
  %v743 = vmul.f32 %v669, %v725
  %v744 = vmul.f32 %v614, %v726
  %v745 = vmul.f32 %v616, %v727
  %v746 = vmul.f32 %v672, %v728
  %v747 = vmul.f32 %v729, 0.16666667
  %v748 = vmul.f32 %v730, 0.16666667
  %v749 = vmul.f32 %v731, 0.16666667
  %v750 = vmul.f32 %v732, 0.16666667
  %v751 = vmul.f32 %v733, 0.16666667
  %v752 = vmul.f32 %v734, 0.16666667
  %v753 = vmul.f32 %v735, 0.16666667
  %v754 = vmul.f32 %v736, 0.16666667
  %v755 = vmul.f32 %v737, 0.16666667
  %v756 = vmul.f32 %v738, 0.16666667
  %v757 = vmul.f32 %v739, 0.16666667
  %v758 = vmul.f32 %v740, 0.16666667
  %v759 = vmul.f32 %v741, 0.16666667
  %v760 = vmul.f32 %v742, 0.16666667
  %v761 = vmul.f32 %v743, 0.16666667
  %v762 = vmul.f32 %v744, 0.16666667
  %v763 = vmul.f32 %v745, 0.16666667
  %v764 = vmul.f32 %v746, 0.16666667
  %v765 = vld [vmem:[%s5] sm:$0xf]
  %v766 = vld [vmem:[%s5 + $0x4] sm:$0xf]
  %v767 = vld [vmem:[%s5 + $0x8] sm:$0xf]
  %v768 = vld [vmem:[%s5 + $0xc] sm:$0xf]
  %v769 = vld [vmem:[%s5 + $0x10] sm:$0xf]
  %v770 = vld [vmem:[%s5 + $0x14] sm:$0xf]
  %v771 = vpack.c.bf16 %v750, %v747
  %v772 = vpack.c.bf16 %v751, %v748
  %v773 = vpack.c.bf16 %v752, %v749
  %v774 = vpack.c.bf16 %v756, %v753
  %v775 = vpack.c.bf16 %v757, %v754
  %v776 = vpack.c.bf16 %v758, %v755
  %v777 = vpack.c.bf16 %v762, %v759
  %v778 = vpack.c.bf16 %v763, %v760
  %v779 = vpack.c.bf16 %v764, %v761
  %v780 = vld [vmem:[%s6] sm:$0xff]
  %v781 = vld [vmem:[%s6 + $0x8] sm:$0xff]
  %v782 = vld [vmem:[%s6 + $0x10] sm:$0xff]
  %v783 = vld [vmem:[%s6 + $0x18] sm:$0xff]
  %v784 = vld [vmem:[%s6 + $0x20] sm:$0xff]
  %v785 = vld [vmem:[%s6 + $0x28] sm:$0xff]
  %787 = vset.pattern.permute.xlu0 0
  %788 = vperm.xlu0 %787, %v780
  %v789 = vpop.permute.xlu0 %788
  %792 = vset.pattern.permute.xlu0 0
  %793 = vperm.xlu0 %792, %v781
  %v794 = vpop.permute.xlu0 %793
  %797 = vset.pattern.permute.xlu0 0
  %798 = vperm.xlu0 %797, %v782
  %v799 = vpop.permute.xlu0 %798
  %802 = vset.pattern.permute.xlu0 0
  %803 = vperm.xlu0 %802, %v783
  %v804 = vpop.permute.xlu0 %803
  %807 = vset.pattern.permute.xlu0 0
  %808 = vperm.xlu0 %807, %v784
  %v809 = vpop.permute.xlu0 %808
  %812 = vset.pattern.permute.xlu0 0
  %813 = vperm.xlu0 %812, %v785
  %v814 = vpop.permute.xlu0 %813
  %v822 = vunpack.c.l.b16 %v765
  %v823 = vunpack.c.l.b16 %v766
  %v824 = vunpack.c.l.b16 %v767
  %v825 = vunpack.c.l.b16 %v768
  %v826 = vunpack.c.l.b16 %v769
  %v827 = vunpack.c.l.b16 %v770
  %v828 = vpack.c.b16 %v823, %v822
  %v829 = vpack.c.b16 %v825, %v824
  %v830 = vpack.c.b16 %v827, %v826
  %v832 = vsel %vm545, %v828, 0
  %v835 = vsel %vm545, %v829, 0
  %v838 = vsel %vm545, %v830, 0
  %840 = vmatprep.subr.bf16.mxu0 0
  %841 = vmatpush1.bf16.msra.mxu0 0
  %842 = vmatprep.subr.bf16.mxu0 0
  %843 = vmatpush1.bf16.msra.mxu0 0
  %844 = vmatprep.subr.bf16.mxu0 0
  %845 = vmatpush1.bf16.msra.mxu0 0
  %846 = vmatprep.subr.bf16.mxu0 0
  %847 = vmatpush1.bf16.msra.mxu0 0
  %848 = vmatprep.subr.bf16.mxu0 0
  %849 = vmatpush1.bf16.msra.mxu0 0
  %850 = vmatprep.subr.bf16.mxu0 %v778
  %851 = vmatpush1.bf16.msra.mxu0 %v777
  %852 = vmatprep.subr.bf16.mxu0 %v775
  %853 = vmatpush1.bf16.msra.mxu0 %v774
  %854 = vmatprep.subr.bf16.mxu0 %v772
  %855 = vmatpush1.bf16.msra.mxu0 %v771
  %856 = vmatprep.subr.bf16.mxu0 0
  %857 = vmatpush2.bf16.msra.mxu0 0
  %858 = vmatprep.subr.bf16.mxu0 0
  %859 = vmatpush2.bf16.msra.mxu0 0
  %860 = vmatprep.subr.bf16.mxu0 0
  %861 = vmatpush2.bf16.msra.mxu0 0
  %862 = vmatprep.subr.bf16.mxu0 0
  %863 = vmatpush2.bf16.msra.mxu0 0
  %864 = vmatprep.subr.bf16.mxu0 0
  %865 = vmatpush2.bf16.msra.mxu0 0
  %866 = vmatprep.subr.bf16.mxu0 0
  %867 = vmatpush2.bf16.msra.mxu0 0
  %868 = vmatprep.subr.bf16.mxu0 0
  %869 = vmatpush2.bf16.msra.mxu0 0
  %870 = vmatprep.subr.bf16.mxu0 0
  %871 = vmatpush2.bf16.msra.mxu0 0
  %872 = vmatprep.mubr.bf16.mxu0 0
  %873 = vmatmul.mubr.bf16.gmra.mxu0 %v832
  %v874 = vpop.f32.mrf.mxu0
  %v875 = vadd.f32 %v789, %v874
  %v876 = vpop.f32.mrf.mxu0
  %v877 = vadd.f32 %v789, %v876
  %v878 = vpop.f32.mrf.mxu0
  %v879 = vadd.f32 %v794, %v878
  %v880 = vpop.f32.mrf.mxu0
  %v881 = vadd.f32 %v794, %v880
  %882 = vmatprep.mubr.bf16.mxu0 0
  %883 = vmatmul.mubr.bf16.gmra.mxu0 %v835
  %v884 = vpop.f32.mrf.mxu0
  %v885 = vadd.f32 %v799, %v884
  %v886 = vpop.f32.mrf.mxu0
  %v887 = vadd.f32 %v799, %v886
  %v888 = vpop.f32.mrf.mxu0
  %v889 = vadd.f32 %v804, %v888
  %v890 = vpop.f32.mrf.mxu0
  %v891 = vadd.f32 %v804, %v890
  %892 = vmatprep.mubr.bf16.mxu0 0
  %893 = vmatmul.mubr.bf16.gmra.mxu0 %v838
  %v894 = vpop.f32.mrf.mxu0
  %v895 = vadd.f32 %v809, %v894
  %v896 = vpop.f32.mrf.mxu0
  %v897 = vadd.f32 %v809, %v896
  %v898 = vpop.f32.mrf.mxu0
  %v899 = vadd.f32 %v814, %v898
  %v900 = vpop.f32.mrf.mxu0
  %v901 = vadd.f32 %v814, %v900
  %902 = vdwg.mxu0
  %903 = vmatprep.subr.bf16.mxu0 0
  %904 = vmatpush1.bf16.msra.mxu0 0
  %905 = vmatprep.subr.bf16.mxu0 0
  %906 = vmatpush1.bf16.msra.mxu0 0
  %907 = vmatprep.subr.bf16.mxu0 0
  %908 = vmatpush1.bf16.msra.mxu0 0
  %909 = vmatprep.subr.bf16.mxu0 0
  %910 = vmatpush1.bf16.msra.mxu0 0
  %911 = vmatprep.subr.bf16.mxu0 0
  %912 = vmatpush1.bf16.msra.mxu0 0
  %913 = vmatprep.subr.bf16.mxu0 0
  %914 = vmatpush1.bf16.msra.mxu0 %v779
  %915 = vmatprep.subr.bf16.mxu0 0
  %916 = vmatpush1.bf16.msra.mxu0 %v776
  %917 = vmatprep.subr.bf16.mxu0 0
  %918 = vmatpush1.bf16.msra.mxu0 %v773
  %919 = vmatprep.subr.bf16.mxu0 0
  %920 = vmatpush2.bf16.msra.mxu0 0
  %921 = vmatprep.subr.bf16.mxu0 0
  %922 = vmatpush2.bf16.msra.mxu0 0
  %923 = vmatprep.subr.bf16.mxu0 0
  %924 = vmatpush2.bf16.msra.mxu0 0
  %925 = vmatprep.subr.bf16.mxu0 0
  %926 = vmatpush2.bf16.msra.mxu0 0
  %927 = vmatprep.subr.bf16.mxu0 0
  %928 = vmatpush2.bf16.msra.mxu0 0
  %929 = vmatprep.subr.bf16.mxu0 0
  %930 = vmatpush2.bf16.msra.mxu0 0
  %931 = vmatprep.subr.bf16.mxu0 0
  %932 = vmatpush2.bf16.msra.mxu0 0
  %933 = vmatprep.subr.bf16.mxu0 0
  %934 = vmatpush2.bf16.msra.mxu0 0
  %935 = vmatprep.mubr.bf16.mxu0 0
  %936 = vmatmul.mubr.bf16.gmra.mxu0 %v832
  %v937 = vpop.f32.mrf.mxu0
  %v938 = vadd.f32 %v789, %v937
  %v939 = vpop.f32.mrf.mxu0
  %v940 = vpop.f32.mrf.mxu0
  %v941 = vadd.f32 %v794, %v940
  %v942 = vpop.f32.mrf.mxu0
  %943 = vmatprep.mubr.bf16.mxu0 0
  %944 = vmatmul.mubr.bf16.gmra.mxu0 %v835
  %v945 = vpop.f32.mrf.mxu0
  %v946 = vadd.f32 %v799, %v945
  %v947 = vpop.f32.mrf.mxu0
  %v948 = vpop.f32.mrf.mxu0
  %v949 = vadd.f32 %v804, %v948
  %v950 = vpop.f32.mrf.mxu0
  %951 = vmatprep.mubr.bf16.mxu0 0
  %952 = vmatmul.mubr.bf16.gmra.mxu0 %v838
  %v953 = vpop.f32.mrf.mxu0
  %v954 = vadd.f32 %v809, %v953
  %v955 = vpop.f32.mrf.mxu0
  %v956 = vpop.f32.mrf.mxu0
  %v957 = vadd.f32 %v814, %v956
  %v958 = vpop.f32.mrf.mxu0
  %959 = vdwg.mxu0
  %v960 = vadd.f32 %v875, 3.0
  %v961 = vadd.f32 %v877, 3.0
  %v962 = vadd.f32 %v938, 3.0
  %v963 = vadd.f32 %v879, 3.0
  %v964 = vadd.f32 %v881, 3.0
  %v965 = vadd.f32 %v941, 3.0
  %v966 = vadd.f32 %v885, 3.0
  %v967 = vadd.f32 %v887, 3.0
  %v968 = vadd.f32 %v946, 3.0
  %v969 = vadd.f32 %v889, 3.0
  %v970 = vadd.f32 %v891, 3.0
  %v971 = vadd.f32 %v949, 3.0
  %v972 = vadd.f32 %v895, 3.0
  %v973 = vadd.f32 %v897, 3.0
  %v974 = vadd.f32 %v954, 3.0
  %v975 = vadd.f32 %v899, 3.0
  %v976 = vadd.f32 %v901, 3.0
  %v977 = vadd.f32 %v957, 3.0
  %v978 = vmax.f32 %v960, 0.0
  %v979 = vmax.f32 %v961, 0.0
  %v980 = vmax.f32 %v962, 0.0
  %v981 = vmax.f32 %v963, 0.0
  %v982 = vmax.f32 %v964, 0.0
  %v983 = vmax.f32 %v965, 0.0
  %v984 = vmax.f32 %v966, 0.0
  %v985 = vmax.f32 %v967, 0.0
  %v986 = vmax.f32 %v968, 0.0
  %v987 = vmax.f32 %v969, 0.0
  %v988 = vmax.f32 %v970, 0.0
  %v989 = vmax.f32 %v971, 0.0
  %v990 = vmax.f32 %v972, 0.0
  %v991 = vmax.f32 %v973, 0.0
  %v992 = vmax.f32 %v974, 0.0
  %v993 = vmax.f32 %v975, 0.0
  %v994 = vmax.f32 %v976, 0.0
  %v995 = vmax.f32 %v977, 0.0
  %v996 = vmin.f32 %v978, 6.0
  %v997 = vmin.f32 %v979, 6.0
  %v998 = vmin.f32 %v980, 6.0
  %v999 = vmin.f32 %v981, 6.0
  %v1000 = vmin.f32 %v982, 6.0
  %v1001 = vmin.f32 %v983, 6.0
  %v1002 = vmin.f32 %v984, 6.0
  %v1003 = vmin.f32 %v985, 6.0
  %v1004 = vmin.f32 %v986, 6.0
  %v1005 = vmin.f32 %v987, 6.0
  %v1006 = vmin.f32 %v988, 6.0
  %v1007 = vmin.f32 %v989, 6.0
  %v1008 = vmin.f32 %v990, 6.0
  %v1009 = vmin.f32 %v991, 6.0
  %v1010 = vmin.f32 %v992, 6.0
  %v1011 = vmin.f32 %v993, 6.0
  %v1012 = vmin.f32 %v994, 6.0
  %v1013 = vmin.f32 %v995, 6.0
  %v1014 = vmul.f32 %v875, %v996
  %v1015 = vmul.f32 %v877, %v997
  %v1016 = vmul.f32 %v938, %v998
  %v1017 = vmul.f32 %v879, %v999
  %v1018 = vmul.f32 %v881, %v1000
  %v1019 = vmul.f32 %v941, %v1001
  %v1020 = vmul.f32 %v885, %v1002
  %v1021 = vmul.f32 %v887, %v1003
  %v1022 = vmul.f32 %v946, %v1004
  %v1023 = vmul.f32 %v889, %v1005
  %v1024 = vmul.f32 %v891, %v1006
  %v1025 = vmul.f32 %v949, %v1007
  %v1026 = vmul.f32 %v895, %v1008
  %v1027 = vmul.f32 %v897, %v1009
  %v1028 = vmul.f32 %v954, %v1010
  %v1029 = vmul.f32 %v899, %v1011
  %v1030 = vmul.f32 %v901, %v1012
  %v1031 = vmul.f32 %v957, %v1013
  %v1032 = vmul.f32 %v1014, 0.16666667
  %v1033 = vmul.f32 %v1015, 0.16666667
  %v1034 = vmul.f32 %v1016, 0.16666667
  %v1035 = vmul.f32 %v1017, 0.16666667
  %v1036 = vmul.f32 %v1018, 0.16666667
  %v1037 = vmul.f32 %v1019, 0.16666667
  %v1038 = vmul.f32 %v1020, 0.16666667
  %v1039 = vmul.f32 %v1021, 0.16666667
  %v1040 = vmul.f32 %v1022, 0.16666667
  %v1041 = vmul.f32 %v1023, 0.16666667
  %v1042 = vmul.f32 %v1024, 0.16666667
  %v1043 = vmul.f32 %v1025, 0.16666667
  %v1044 = vmul.f32 %v1026, 0.16666667
  %v1045 = vmul.f32 %v1027, 0.16666667
  %v1046 = vmul.f32 %v1028, 0.16666667
  %v1047 = vmul.f32 %v1029, 0.16666667
  %v1048 = vmul.f32 %v1030, 0.16666667
  %v1049 = vmul.f32 %v1031, 0.16666667
  %v1050 = vld [vmem:[%s7] sm:$0xff]
  %v1051 = vld [vmem:[%s7 + $0x8] sm:$0xff]
  %v1052 = vld [vmem:[%s7 + $0x10] sm:$0xff]
  %v1053 = vld [vmem:[%s7 + $0x18] sm:$0xff]
  %v1054 = vld [vmem:[%s7 + $0x20] sm:$0xff]
  %v1055 = vld [vmem:[%s7 + $0x28] sm:$0xff]
  %1057 = vset.pattern.permute.xlu0 0
  %1058 = vperm.xlu0 %1057, %v1050
  %v1059 = vpop.permute.xlu0 %1058
  %1062 = vset.pattern.permute.xlu0 0
  %1063 = vperm.xlu0 %1062, %v1051
  %v1064 = vpop.permute.xlu0 %1063
  %1067 = vset.pattern.permute.xlu0 0
  %1068 = vperm.xlu0 %1067, %v1052
  %v1069 = vpop.permute.xlu0 %1068
  %1072 = vset.pattern.permute.xlu0 0
  %1073 = vperm.xlu0 %1072, %v1053
  %v1074 = vpop.permute.xlu0 %1073
  %1077 = vset.pattern.permute.xlu0 0
  %1078 = vperm.xlu0 %1077, %v1054
  %v1079 = vpop.permute.xlu0 %1078
  %1082 = vset.pattern.permute.xlu0 0
  %1083 = vperm.xlu0 %1082, %v1055
  %v1084 = vpop.permute.xlu0 %1083
  %v1086 = vmul.f32 %v1032, %v1059
  %v1087 = vmul.f32 %v1033, %v1059
  %v1088 = vmul.f32 %v1034, %v1059
  %v1089 = vmul.f32 %v1035, %v1064
  %v1090 = vmul.f32 %v1036, %v1064
  %v1091 = vmul.f32 %v1037, %v1064
  %v1092 = vmul.f32 %v1038, %v1069
  %v1093 = vmul.f32 %v1039, %v1069
  %v1094 = vmul.f32 %v1040, %v1069
  %v1095 = vmul.f32 %v1041, %v1074
  %v1096 = vmul.f32 %v1042, %v1074
  %v1097 = vmul.f32 %v1043, %v1074
  %v1098 = vmul.f32 %v1044, %v1079
  %v1099 = vmul.f32 %v1045, %v1079
  %v1100 = vmul.f32 %v1046, %v1079
  %v1101 = vmul.f32 %v1047, %v1084
  %v1102 = vmul.f32 %v1048, %v1084
  %v1103 = vmul.f32 %v1049, %v1084
  %v1104 = vadd.f32 %v1086, %v1089
  %v1105 = vadd.f32 %v1104, %v1092
  %v1106 = vadd.f32 %v1105, %v1095
  %v1107 = vadd.f32 %v1106, %v1098
  %v1108 = vadd.f32 %v1107, %v1101
  %v1109 = vrot.slane %v1108, 4
  %v1110 = vadd.f32 %v1108, %v1109
  %v1111 = vrot.slane %v1110, 2
  %v1112 = vadd.f32 %v1110, %v1111
  %v1113 = vrot.slane %v1112, 1
  %v1114 = vadd.f32 %v1112, %v1113
  %v1115 = vadd.f32 %v1087, %v1090
  %v1116 = vadd.f32 %v1115, %v1093
  %v1117 = vadd.f32 %v1116, %v1096
  %v1118 = vadd.f32 %v1117, %v1099
  %v1119 = vadd.f32 %v1118, %v1102
  %v1120 = vrot.slane %v1119, 4
  %v1121 = vadd.f32 %v1119, %v1120
  %v1122 = vrot.slane %v1121, 2
  %v1123 = vadd.f32 %v1121, %v1122
  %v1124 = vrot.slane %v1123, 1
  %v1125 = vadd.f32 %v1123, %v1124
  %v1126 = vadd.f32 %v1088, %v1091
  %v1127 = vadd.f32 %v1126, %v1094
  %v1128 = vadd.f32 %v1127, %v1097
  %v1129 = vadd.f32 %v1128, %v1100
  %v1130 = vadd.f32 %v1129, %v1103
  %v1131 = vrot.slane %v1130, 4
  %v1132 = vadd.f32 %v1130, %v1131
  %v1133 = vrot.slane %v1132, 2
  %v1134 = vadd.f32 %v1132, %v1133
  %v1135 = vrot.slane %v1134, 1
  %v1136 = vadd.f32 %v1134, %v1135
  %s1137 = sld [smem:[#allocation2]]
  %v1138 = vstv %s1137
  %v1139 = vadd.f32 %v1114, %v1138
  %v1140 = vadd.f32 %v1125, %v1138
  %v1141 = vadd.f32 %v1136, %v1138
  %v1145 = vcombine.low %v1139, %v1140
  %v1147 = vunpack.c.l.s4 1966171168
  %v1148 = vunpack.c.0.s8 %v1147
  %v1149 = vlaneseq
  %v1150 = vshrl.u32 %v1149, 7
  %v1151 = vsub.s32 %v1148, %v1150
  %v1152 = vrot.slane %v1145, %v1151
  %v1154 = vunpack.c.l.s4 1966171168
  %v1155 = vunpack.c.0.s8 %v1154
  %v1156 = vlaneseq
  %v1157 = vshrl.u32 %v1156, 7
  %v1158 = vsub.s32 %v1155, %v1157
  %v1159 = vrot.slane %v1141, %v1158
  %v1160 = vcombine.low %v1152, %v1159
  %v1162 = vunpack.c.l.s4 1966171168
  %v1163 = vunpack.c.0.s8 %v1162
  %v1164 = vlaneseq
  %v1165 = vshrl.u32 %v1164, 7
  %v1166 = vsub.s32 %v1163, %v1165
  %v1167 = vrot.slane %v1160, %v1166
  %v1169 = vlaneseq
  %vm1170 = vcmp.ge.s32.totalorder %v1169, 0
  %vm1171 = vcmp.lt.s32.totalorder %v1169, 384
  %vm1172 = vmand %vm1170, %vm1171
  %1173 = vst.msk [vmem:[%s9] sm:$0x7] %vm1172, %v1167
  // Predicated region
  $region38: #{critic_adv_forward.1} parent=0 // pred_check
    _
  $region39: #{critic_adv_forward.1} parent=0 // pred_check_branch
    %1175 = sbr.rel (0) target = $region41
  $region40: #{critic_adv_forward.1} parent=0 // pred_region
    _
  $region41: #{critic_adv_forward.1} parent=0 // pred_fallthru
    _
  // Predicated region
  $region42: #{critic_adv_forward.1} parent=0 // pred_check
    _
  $region43: #{critic_adv_forward.1} parent=0 // pred_check_branch
    %1177 = sbr.rel (0) target = $region45
  $region44: #{critic_adv_forward.1} parent=0 // pred_region
    _
  $region45: #{critic_adv_forward.1} parent=0 // pred_fallthru
    _

</llo_original>
